<compile_context>
chip_gen: v7x
topology: tpu7x:2x2x1
jax: 0.10.0
libtpu: 0.0.40
codegen_flags: <defaults>
</compile_context>

<pallas_src>
import functools

import jax
import jax.numpy as jnp
from jax.experimental import pallas as pl
from jax.experimental.pallas import tpu as pltpu

_LANES = 128
_SUBLANES = 8
_GROUP = _LANES * _SUBLANES            # 1024 elements per (8, 128) vreg group
_MAX_TILE_BYTES = 2 * 1024 * 1024      # ~2 MiB per input per pipeline buffer


def _cdiv(a: int, b: int) -> int:
    return -(-a // b)


@functools.lru_cache(maxsize=1)
def _num_tensorcores() -> int:
    """Best-effort TensorCores-per-chip (2 on v7x, 1 on v5e/v6e). Never raises."""
    try:
        info = pltpu.get_tpu_info()
        for name in ("num_cores", "num_tensorcores", "tensorcores_per_chip",
                     "cores_per_chip", "core_count"):
            v = getattr(info, name, None)
            if isinstance(v, int) and v >= 1:
                return max(1, min(2, v))
    except Exception:
        pass
    try:
        kind = jax.devices()[0].device_kind.lower()
        if "v7" in kind or "7x" in kind:
            return 2
    except Exception:
        pass
    return 1


# ----------------------------------------------------------------------------
# Pallas kernel: tiled sum of squared differences.
# grid = (num_partials [parallel], num_inner [arbitrary/reduction])
# ----------------------------------------------------------------------------
def _make_sq_err_kernel(rows: int, tile_rows: int, num_inner: int,
                        needs_mask: bool):
    def kernel(yhat_ref, y_ref, out_ref, acc_ref):
        # Zero the vreg-shaped accumulator at the start of this partial's sweep.
        @pl.when(pl.program_id(1) == 0)
        def _():
            acc_ref[...] = jnp.zeros_like(acc_ref)

        # Cast to f32 inside the kernel (inputs arrive in their native dtype,
        # so bf16 callers stream half the HBM bytes).
        d = yhat_ref[...].astype(jnp.float32) - y_ref[...].astype(jnp.float32)

        if needs_mask:
            # Only emitted when rows % tile_rows != 0: the (single) edge block
            # contains unspecified data past the valid extent; select it to 0
            # before squaring.  Pure VPU work, hidden under the DMA.
            tile = pl.program_id(0) * num_inner + pl.program_id(1)
            row_id = jax.lax.broadcasted_iota(jnp.int32, d.shape, 0)
            d = jnp.where(row_id < (rows - tile * tile_rows), d, 0.0)

        sq = d * d
        tr = sq.shape[0]
        # Sublane-aligned partial sums straight into the (8, 128) accumulator:
        # per-step hot path is VPU-only, no cross-lane XLU reduce.
        acc_ref[...] += sq.reshape(tr // _SUBLANES, _SUBLANES, _LANES).sum(axis=0)

        # Write the lane-dense per-partial accumulator on the last inner step.
        @pl.when(pl.program_id(1) == pl.num_programs(1) - 1)
        def _():
            out_ref[...] = acc_ref[...].reshape(1, _SUBLANES, _LANES)

    return kernel


def sq_err_sum(yhat: jax.Array, y: jax.Array) -> jax.Array:
    """Sum of squared differences over all elements (bulk done in Pallas)."""
    assert yhat.shape == y.shape, "yhat / y must have identical shapes"
    n = int(yhat.size)
    if n == 0:
        return jnp.float32(0.0)

    flat_yhat = yhat.reshape(-1)   # bitcast for contiguous inputs, no HBM copy
    flat_y = y.reshape(-1)
    itemsize = max(yhat.dtype.itemsize, y.dtype.itemsize)

    rows = n // _LANES
    n_body = rows * _LANES if rows >= _SUBLANES else 0

    total = jnp.float32(0.0)

    # Ragged tail (< 128 elements) / tiny inputs: plain jnp, negligible bytes.
    if n_body < n:
        # TODO(synk): for *large* lane-ragged inputs the prefix slice below
        # still costs one extra HBM copy of the body; removing it needs a
        # 1-D manual-DMA kernel.  The sub-128 tail itself is trivial.
        t_yhat = flat_yhat[n_body:].astype(jnp.float32)
        t_y = flat_y[n_body:].astype(jnp.float32)
        total = total + jnp.sum((t_yhat - t_y) ** 2)

    if n_body == 0:
        return total

    body_yhat = flat_yhat if n_body == n else flat_yhat[:n_body]
    body_y = flat_y if n_body == n else flat_y[:n_body]
    yhat2 = body_yhat.reshape(rows, _LANES)
    y2 = body_y.reshape(rows, _LANES)

    # Tile sizing by bytes: ~2 MiB per input per buffer (4096 rows f32 / 8192
    # bf16).  2 inputs x 2 buffers x 2 MiB = 8 MiB, inside default scoped VMEM
    # on v5e/v6e/v7x, so vmem_limit_bytes is left at its default.
    cap_rows = max(
        _SUBLANES,
        (_MAX_TILE_BYTES // (_LANES * itemsize)) // _SUBLANES * _SUBLANES,
    )
    tile_rows = min(cap_rows, (rows // _SUBLANES) * _SUBLANES)
    num_tiles = _cdiv(rows, tile_rows)

    # Partial split only on multi-TensorCore chips (v7x); single-TC chips
    # (v5e/v6e) keep one clean reduction sweep.
    cores = _num_tensorcores()
    if cores > 1 and num_tiles >= cores and num_tiles % cores == 0:
        num_partials = cores
    else:
        num_partials = 1
    num_inner = num_tiles // num_partials

    needs_mask = (rows % tile_rows) != 0
    kernel = _make_sq_err_kernel(rows, tile_rows, num_inner, needs_mask)

    in_map = lambda p, i: (p * num_inner + i, 0)

    cost = pl.CostEstimate(
        flops=3 * n_body,
        transcendentals=0,
        bytes_accessed=2 * n_body * itemsize + num_partials * _GROUP * 4,
    )

    partials = pl.pallas_call(
        kernel,
        out_shape=jax.ShapeDtypeStruct(
            (num_partials, _SUBLANES, _LANES), jnp.float32
        ),
        grid_spec=pltpu.PrefetchScalarGridSpec(
            num_scalar_prefetch=0,
            grid=(num_partials, num_inner),
            in_specs=[
                pl.BlockSpec((tile_rows, _LANES), in_map),
                pl.BlockSpec((tile_rows, _LANES), in_map),
            ],
            out_specs=pl.BlockSpec(
                (1, _SUBLANES, _LANES), lambda p, i: (p, 0, 0)
            ),
            scratch_shapes=[pltpu.VMEM((_SUBLANES, _LANES), jnp.float32)],
        ),
        # TODO(synk): on v7x, if profiling shows a single TC running every grid
        # step, switch axis 0 to pltpu.CORE_PARALLEL (or pl.core_map) so both
        # TensorCores each stream half the rows.
        compiler_params=pltpu.CompilerParams(
            dimension_semantics=("parallel", "arbitrary"),
        ),
        cost_estimate=cost,
    )(yhat2, y2)

    # Tiny final reduce over num_partials * 1024 f32 values.
    return total + jnp.sum(partials)


# ----------------------------------------------------------------------------
# Module ports.
# ----------------------------------------------------------------------------
class LossFunc:
    """JAX port of the abstract PyTorch LossFunc base class (no parameters)."""

    def __init__(self):
        pass

    def forward(self, yhat, y):
        # Exact abstract-base semantics: empty list, no tensor compute.
        loss = []
        return loss

    def __call__(self, *args, **kwargs):
        return self.forward(*args, **kwargs)


class MSELoss(LossFunc):
    """loss = torch.norm(yhat - y).pow(2) / y.shape[0]  (Frobenius norm squared).

    Note: division is by the batch dim only (matches the PyTorch reference),
    not element-mean nn.MSELoss semantics.
    """

    def __init__(self):
        super().__init__()

    def forward(self, y, yhat):
        return sq_err_sum(yhat, y) / y.shape[0]


if __name__ == "__main__":
    key = jax.random.PRNGKey(0)
    k1, k2, k3, k4 = jax.random.split(key, 4)

    # Small NCHW example inputs consistent with a loss(y, yhat) call.
    yhat = jax.random.normal(k1, (2, 4, 16, 16), dtype=jnp.float32)
    y = jax.random.normal(k2, (2, 4, 16, 16), dtype=jnp.float32)

    mod = MSELoss()
    loss = jax.block_until_ready(mod(y, yhat))
    ref = jnp.sum((yhat - y) ** 2) / y.shape[0]
    assert jnp.allclose(loss, ref, rtol=1e-5, atol=1e-5), (loss, ref)

    # Abstract base keeps its original (empty-list) semantics.
    assert LossFunc()(yhat, y) == []

    # Multi-tile path with a partial (masked) last tile: rows = 8385, tile 4096.
    yhat_b = jax.random.normal(k3, (65, 129, 128), dtype=jnp.float32)
    y_b = jax.random.normal(k4, (65, 129, 128), dtype=jnp.float32)
    sse_b = jax.block_until_ready(sq_err_sum(yhat_b, y_b))
    ref_b = jnp.sum((yhat_b - y_b) ** 2)
    assert jnp.allclose(sse_b, ref_b, rtol=1e-4, atol=1e-2), (sse_b, ref_b)

    # Lane-ragged (non-128-multiple) shape exercises the jnp tail path.
    yhat_r = jax.random.normal(k1, (3, 5, 7, 11), dtype=jnp.float32)
    y_r = jax.random.normal(k2, (3, 5, 7, 11), dtype=jnp.float32)
    sse_r = jax.block_until_ready(sq_err_sum(yhat_r, y_r))
    ref_r = jnp.sum((yhat_r - y_r) ** 2)
    assert jnp.allclose(sse_r, ref_r, rtol=1e-5, atol=1e-3), (sse_r, ref_r)

    # bf16 inputs: cast happens inside the kernel (halves HBM traffic).
    yhat_h = yhat_b.astype(jnp.bfloat16)
    y_h = y_b.astype(jnp.bfloat16)
    sse_h = jax.block_until_ready(sq_err_sum(yhat_h, y_h))
    ref_h = jnp.sum(
        (yhat_h.astype(jnp.float32) - y_h.astype(jnp.float32)) ** 2
    )
    assert jnp.allclose(sse_h, ref_h, rtol=1e-4, atol=1e-2), (sse_h, ref_h)

    print("KERNEL_OK")
</pallas_src>

<mosaic_0001>
module attributes {stable_mosaic.version = 11 : i64} {
  func.func @kernel(%arg0: i32, %arg1: i32, %arg2: memref<16x128xf32, #tpu.memory_space<vmem>>, %arg3: memref<16x128xf32, #tpu.memory_space<vmem>>, %arg4: memref<1x8x128xf32, #tpu.memory_space<vmem>>, %arg5: memref<8x128xf32, #tpu.memory_space<vmem>>) attributes {dimension_semantics = [#tpu.dimension_semantics<parallel>, #tpu.dimension_semantics<arbitrary>], iteration_bounds = array<i64: 1, 1>, scalar_prefetch = 0 : i64, scratch_operands = 1 : i64, tpu.core_type = #tpu.core_type<tc>, window_params = [{transform_indices = @transform_0, window_bounds = array<i64: 16, 128>}, {transform_indices = @transform_1, window_bounds = array<i64: 16, 128>}, {transform_indices = @transform_2, window_bounds = array<i64: 1, 8, 128>}]} {
    %c0_i32 = arith.constant 0 : i32
    %0 = arith.cmpi eq, %arg1, %c0_i32 : i32
    %1 = arith.extui %0 : i1 to i32
    %c0_i32_0 = arith.constant 0 : i32
    %2 = arith.cmpi ne, %1, %c0_i32_0 : i32
    scf.if %2 {
      %cst_10 = arith.constant 0.000000e+00 : f32
      %15 = vector.broadcast %cst_10 : f32 to vector<8x128xf32>
      %c0_11 = arith.constant 0 : index
      %c0_12 = arith.constant 0 : index
      %16 = vector.load %arg5[%c0_11, %c0_12] : memref<8x128xf32, #tpu.memory_space<vmem>>, vector<8x128xf32>
      tpu.vector_store %arg5[%c0_11, %c0_12], %15 {strides = array<i32>} : memref<8x128xf32, #tpu.memory_space<vmem>>, vector<8x128xf32>,
    } else {
    }
    %c0 = arith.constant 0 : index
    %c0_1 = arith.constant 0 : index
    %3 = vector.load %arg2[%c0, %c0_1] : memref<16x128xf32, #tpu.memory_space<vmem>>, vector<16x128xf32>
    %c0_2 = arith.constant 0 : index
    %c0_3 = arith.constant 0 : index
    %4 = vector.load %arg3[%c0_2, %c0_3] : memref<16x128xf32, #tpu.memory_space<vmem>>, vector<16x128xf32>
    %5 = arith.subf %3, %4 : vector<16x128xf32>
    %6 = arith.mulf %5, %5 : vector<16x128xf32>
    %c0_4 = arith.constant 0 : index
    %c0_5 = arith.constant 0 : index
    %7 = vector.load %arg5[%c0_4, %c0_5] : memref<8x128xf32, #tpu.memory_space<vmem>>, vector<8x128xf32>
    %8 = vector.shape_cast %6 : vector<16x128xf32> to vector<2x8x128xf32>
    %cst = arith.constant dense<0.000000e+00> : vector<8x128xf32>
    %9 = vector.multi_reduction <add>, %8, %cst [0] : vector<2x8x128xf32> to vector<8x128xf32>
    %10 = arith.addf %7, %9 : vector<8x128xf32>
    %c0_6 = arith.constant 0 : index
    %c0_7 = arith.constant 0 : index
    %11 = vector.load %arg5[%c0_6, %c0_7] : memref<8x128xf32, #tpu.memory_space<vmem>>, vector<8x128xf32>
    tpu.vector_store %arg5[%c0_6, %c0_7], %10 {strides = array<i32>} : memref<8x128xf32, #tpu.memory_space<vmem>>, vector<8x128xf32>,
    %c0_i32_8 = arith.constant 0 : i32
    %12 = arith.cmpi eq, %arg1, %c0_i32_8 : i32
    %13 = arith.extui %12 : i1 to i32
    %c0_i32_9 = arith.constant 0 : i32
    %14 = arith.cmpi ne, %13, %c0_i32_9 : i32
    scf.if %14 {
      %c0_10 = arith.constant 0 : index
      %c0_11 = arith.constant 0 : index
      %15 = vector.load %arg5[%c0_10, %c0_11] : memref<8x128xf32, #tpu.memory_space<vmem>>, vector<8x128xf32>
      %16 = vector.shape_cast %15 : vector<8x128xf32> to vector<1x8x128xf32>
      %c0_12 = arith.constant 0 : index
      %c0_13 = arith.constant 0 : index
      %c0_14 = arith.constant 0 : index
      %17 = vector.load %arg4[%c0_12, %c0_13, %c0_14] : memref<1x8x128xf32, #tpu.memory_space<vmem>>, vector<1x8x128xf32>
      tpu.vector_store %arg4[%c0_12, %c0_13, %c0_14], %16 {strides = array<i32>} : memref<1x8x128xf32, #tpu.memory_space<vmem>>, vector<1x8x128xf32>,
    } else {
    }
    return
  }
  func.func @transform_0(%arg0: i32, %arg1: i32) -> (i32, i32) {
    %c1_i32 = arith.constant 1 : i32
    %0 = arith.muli %arg0, %c1_i32 : i32
    %1 = arith.addi %0, %arg1 : i32
    %c0_i32 = arith.constant 0 : i32
    %c0_i32_0 = arith.constant 0 : i32
    return %1, %c0_i32 : i32, i32
  }
  func.func @transform_1(%arg0: i32, %arg1: i32) -> (i32, i32) {
    %c1_i32 = arith.constant 1 : i32
    %0 = arith.muli %arg0, %c1_i32 : i32
    %1 = arith.addi %0, %arg1 : i32
    %c0_i32 = arith.constant 0 : i32
    %c0_i32_0 = arith.constant 0 : i32
    return %1, %c0_i32 : i32, i32
  }
  func.func @transform_2(%arg0: i32, %arg1: i32) -> (i32, i32, i32) {
    %c0_i32 = arith.constant 0 : i32
    %c0_i32_0 = arith.constant 0 : i32
    %c0_i32_1 = arith.constant 0 : i32
    return %arg0, %c0_i32, %c0_i32_0 : i32, i32, i32
  }
}

</mosaic_0001>

<llo_original>
// kernel: tpu_custom_call.1
$region0: #{tpu_custom_call.1}
  #allocation0 [shape = 'u32[]', space=smem, size = 0x4, offset = 0x4, fixed_abs, tag = 'smem constant byte address 0x4 - core index']
  #allocation1 [shape = 'u32[144,128]{1,0:T(1,128)}', space=vmem, size = 0x12000, scoped, tag = 'internal scratch']
  #allocation2 [shape = 'f32[8,128]{1,0:T(8,128)}', space=vmem, size = 0x1000, scoped, tag = 'scratch operand']
  %s0 = inlined_call_operand.hbm [shape: f32[16,128], index: 0, kind: input, shape index: {}]
  %s1 = inlined_call_operand.hbm [shape: f32[16,128], index: 1, kind: input, shape index: {}]
  %s2 = inlined_call_operand.hbm [shape: f32[1,8,128], index: 2, kind: output, shape index: {}]
  %s3 = sld [smem:[#allocation0]]
  $region34: #{tpu_custom_call.1} parent=0
    _
  %s5 = ssub.s32 1, %s3
  %s6 = scalar_select 0, %s5, %s3
  $region1: #{tpu_custom_call.1} parent=0
    #allocation3 [shape = 'u8[8192]{0}', space=vmem, size = 0x2000, scoped, tag = 'input window, operand 0, single buffered']
    #allocation4 [shape = 's32[1]{0}', space=sflag, size = 0x4, scoped, tag = 'scoped memory for tpu_custom_call.1']
    #allocation5 [shape = 's32[1]{0}', space=sflag, size = 0x4, scoped, tag = 'scoped memory for tpu_custom_call.1']
    #allocation6 [shape = 'u8[8192]{0}', space=vmem, size = 0x2000, scoped, tag = 'input window, operand 1, single buffered']
    #allocation7 [shape = 's32[1]{0}', space=sflag, size = 0x4, scoped, tag = 'scoped memory for tpu_custom_call.1']
    #allocation8 [shape = 'u8[4096]{0}', space=vmem, size = 0x1000, scoped, tag = 'output window, operand 0, single buffered']
    %7 = vsyncpa [#allocation4], 0
    %8 = vsyncpa [#allocation7], 0
    %9 = vsyncpa [#allocation5], 0
    // Predicated region
    $region2: #{tpu_custom_call.1} parent=1 // pred_check
      _
    $region3: #{tpu_custom_call.1} parent=1 // pred_check_branch
      %11 = sbr.rel (0) target = $region5
    $region4: #{tpu_custom_call.1} parent=1 // pred_region
      %s12 = sadd.s32 0, 0
      %s13 = smul.u32 2, %s12
      %s15 = ssub.s32 256, 256
      %16 = vsyncadd [#allocation4], %s15
      %s17 = smul.addr %s13, 128
      %s18 = scalar_lea.hbm %s0, %s17
      %s19 = sshll.u32 [#allocation3], 4
      %s20 = int_to_ptr.vmem [resolvable:$true] %s19
      %25 = dma.hbm_to_vmem [thread:$0]  %s18, 256, %s20, [#allocation4], 128, 128, 8
    $region5: #{tpu_custom_call.1} parent=1 // pred_fallthru
      _
    // Predicated region
    $region6: #{tpu_custom_call.1} parent=1 // pred_check
      _
    $region7: #{tpu_custom_call.1} parent=1 // pred_check_branch
      %27 = sbr.rel (0) target = $region9
    $region8: #{tpu_custom_call.1} parent=1 // pred_region
      %s28 = sadd.s32 0, 0
      %s29 = smul.u32 2, %s28
      %s31 = ssub.s32 256, 256
      %32 = vsyncadd [#allocation7], %s31
      %s33 = smul.addr %s29, 128
      %s34 = scalar_lea.hbm %s1, %s33
      %s35 = sshll.u32 [#allocation6], 4
      %s36 = int_to_ptr.vmem [resolvable:$true] %s35
      %41 = dma.hbm_to_vmem [thread:$0]  %s34, 256, %s36, [#allocation7], 128, 128, 8
    $region9: #{tpu_custom_call.1} parent=1 // pred_fallthru
      _
    // Predicated region
    $region10: #{tpu_custom_call.1} parent=1 // pred_check
      _
    $region11: #{tpu_custom_call.1} parent=1 // pred_check_branch
      %43 = sbr.rel (0) target = $region13
    $region12: #{tpu_custom_call.1} parent=1 // pred_region
      %44 = dma.done [#allocation4], 256
    $region13: #{tpu_custom_call.1} parent=1 // pred_fallthru
      _
    // Predicated region
    $region14: #{tpu_custom_call.1} parent=1 // pred_check
      _
    $region15: #{tpu_custom_call.1} parent=1 // pred_check_branch
      %46 = sbr.rel (0) target = $region17
    $region16: #{tpu_custom_call.1} parent=1 // pred_region
      %47 = dma.done [#allocation7], 256
    $region17: #{tpu_custom_call.1} parent=1 // pred_fallthru
      _
    %s48 = sadd.s32 0, 0
    %s49 = smul.u32 2, %s48
    %s50 = sadd.s32 0, 0
    %s51 = smul.u32 2, %s50
    %p52 = scmp.eq.s32.totalorder 0, 0
    // Predicated region
    $region18: #{tpu_custom_call.1} parent=1 // pred_check
      %p53 = pneg %p52
    $region19: #{tpu_custom_call.1} parent=1 // pred_check_branch
      %55 = sbr.rel (%p53) target = $region21
    $region20: #{tpu_custom_call.1} parent=1 // pred_region
      %56 = vst [vmem:[#allocation2] sm:$0xff] 0.0
    $region21: #{tpu_custom_call.1} parent=1 // pred_fallthru
      _
    %v57 = vld [vmem:[#allocation3] sm:$0xff]
    %v58 = vld [vmem:[#allocation3 + $0x8] sm:$0xff]
    %v59 = vld [vmem:[#allocation6] sm:$0xff]
    %v60 = vld [vmem:[#allocation6 + $0x8] sm:$0xff]
    %v61 = vsub.f32 %v57, %v59
    %v62 = vsub.f32 %v58, %v60
    %v63 = vmul.f32 %v61, %v61
    %v64 = vmul.f32 %v62, %v62
    %v65 = vld [vmem:[#allocation2] sm:$0xff]
    %v66 = vadd.f32 %v63, %v64
    %v67 = vadd.f32 %v65, %v66
    %68 = vst [vmem:[#allocation2] sm:$0xff] %v67
    // Predicated region
    $region22: #{tpu_custom_call.1} parent=1 // pred_check
      %p69 = pneg %p52
    $region23: #{tpu_custom_call.1} parent=1 // pred_check_branch
      %71 = sbr.rel (%p69) target = $region25
    $region24: #{tpu_custom_call.1} parent=1 // pred_region
      %v72 = vld [vmem:[#allocation2] sm:$0xff]
      %73 = vst [vmem:[#allocation8] sm:$0xff] %v72
    $region25: #{tpu_custom_call.1} parent=1 // pred_fallthru
      _
    // Predicated region
    $region26: #{tpu_custom_call.1} parent=1 // pred_check
      _
    $region27: #{tpu_custom_call.1} parent=1 // pred_check_branch
      %75 = sbr.rel (0) target = $region29
    $region28: #{tpu_custom_call.1} parent=1 // pred_region
      %s77 = ssub.s32 128, 128
      %78 = vsyncadd [#allocation5], %s77
      %s80 = sshll.u32 [#allocation8], 4
      %s81 = int_to_ptr.vmem [resolvable:$true] %s80
      %83 = dma.vmem_to_hbm [thread:$0]  %s81, 128, %s2, [#allocation5]
    $region29: #{tpu_custom_call.1} parent=1 // pred_fallthru
      _
    // Predicated region
    $region30: #{tpu_custom_call.1} parent=1 // pred_check
      _
    $region31: #{tpu_custom_call.1} parent=1 // pred_check_branch
      %85 = sbr.rel (0) target = $region33
    $region32: #{tpu_custom_call.1} parent=1 // pred_region
      %86 = dma.done [#allocation5], 128
    $region33: #{tpu_custom_call.1} parent=1 // pred_fallthru
      _
    %87 = vsyncpa [#allocation4], 1
    %88 = vsyncpa [#allocation7], 1
    %89 = vsyncpa [#allocation5], 1

</llo_original>
